<compile_context>
chip_gen: v7x
topology: tpu7x:2x2x1
jax: 0.10.0
libtpu: 0.0.40
codegen_flags: <defaults>
</compile_context>

<pallas_src>
import functools

import jax
import jax.numpy as jnp
from jax.experimental import pallas as pl
from jax.experimental.pallas import tpu as pltpu

LANE = 128         # lane width: pad class dim up to this for unmasked stores
BF16_SUBLANE = 16  # bf16 sublane tile


def _round_up(n, m):
    return ((n + m - 1) // m) * m


def dnn_kernel(x_ref, w1_ref, b1_ref, w2_ref, b2_ref, o_ref):
    # fc1 on the MXU: bf16 inputs, f32 accumulation.
    h = jnp.dot(x_ref[...], w1_ref[...], preferred_element_type=jnp.float32)
    # f32 epilogue (bias + ReLU) on the VPU.
    h = jnp.maximum(h + b1_ref[...], 0.0)
    # fc2: bf16 inputs again, f32 accumulation. Output tile is lane-dense (128).
    out = jnp.dot(h.astype(jnp.bfloat16), w2_ref[...],
                  preferred_element_type=jnp.float32)
    o_ref[...] = out + b2_ref[...]


def prepare_params(w1, b1, w2, b2):
    """One-time parameter prep: bf16 weights, (1, N) f32 biases, class dim
    zero-padded to a lane-dense multiple of 128."""
    hidden = w1.shape[1]
    num_classes = w2.shape[1]
    nc_pad = _round_up(num_classes, LANE)
    w2p = jnp.zeros((hidden, nc_pad), jnp.float32).at[:, :num_classes].set(w2)
    b2p = jnp.zeros((1, nc_pad), jnp.float32).at[:, :num_classes].set(b2)
    kernel_params = (
        w1.astype(jnp.bfloat16),                       # (in, hidden) bf16
        b1.reshape(1, hidden).astype(jnp.float32),     # (1, hidden)  f32
        w2p.astype(jnp.bfloat16),                      # (hidden, nc_pad) bf16
        b2p,                                           # (1, nc_pad)  f32
    )
    return kernel_params, num_classes


@functools.partial(jax.jit, static_argnames=("num_classes",))
def dnn_forward(x, w1_bf, b1_2d, w2p_bf, b2p_2d, *, num_classes):
    """x: (B, input_size) f32. Returns (B, num_classes) f32."""
    B, input_size = x.shape
    hidden = w1_bf.shape[1]
    nc_pad = w2p_bf.shape[1]

    # Batch tile: multiple of 16 (bf16 sublanes); cap at 128 rows per step.
    TB = min(128, _round_up(B, BF16_SUBLANE))
    B_pad = _round_up(B, TB)

    xb = x.astype(jnp.bfloat16)
    if B_pad != B:
        xb = jnp.pad(xb, ((0, B_pad - B), (0, 0)))

    out = pl.pallas_call(
        dnn_kernel,
        out_shape=jax.ShapeDtypeStruct((B_pad, nc_pad), jnp.float32),
        grid=(B_pad // TB,),
        in_specs=[
            pl.BlockSpec((TB, input_size), lambda i: (i, 0)),       # x tile
            pl.BlockSpec((input_size, hidden), lambda i: (0, 0)),   # w1 resident
            pl.BlockSpec((1, hidden), lambda i: (0, 0)),            # b1 resident
            pl.BlockSpec((hidden, nc_pad), lambda i: (0, 0)),       # w2 resident
            pl.BlockSpec((1, nc_pad), lambda i: (0, 0)),            # b2 resident
        ],
        out_specs=pl.BlockSpec((TB, nc_pad), lambda i: (i, 0)),
        compiler_params=pltpu.CompilerParams(
            dimension_semantics=("parallel",),          # megacore-shardable
            vmem_limit_bytes=32 * 1024 * 1024,
        ),
    )(xb, w1_bf, b1_2d, w2p_bf, b2p_2d)

    return out[:B, :num_classes]


def init_params(key, input_size, hidden_size, num_classes):
    """Deterministic init mimicking nn.Linear (uniform +-1/sqrt(fan_in)),
    stored as (in, out) = transpose of torch's (out, in)."""
    k1, k2, k3, k4 = jax.random.split(key, 4)
    lim1 = 1.0 / jnp.sqrt(jnp.float32(input_size))
    lim2 = 1.0 / jnp.sqrt(jnp.float32(hidden_size))
    w1 = jax.random.uniform(k1, (input_size, hidden_size), jnp.float32, -lim1, lim1)
    b1 = jax.random.uniform(k2, (hidden_size,), jnp.float32, -lim1, lim1)
    w2 = jax.random.uniform(k3, (hidden_size, num_classes), jnp.float32, -lim2, lim2)
    b2 = jax.random.uniform(k4, (num_classes,), jnp.float32, -lim2, lim2)
    return w1, b1, w2, b2


if __name__ == "__main__":
    batch = 8
    input_size = 32
    hidden_size = 128
    num_classes = 4

    key = jax.random.PRNGKey(0)
    kx, kp = jax.random.split(key)
    x = jax.random.normal(kx, (batch, input_size), dtype=jnp.float32)
    w1, b1, w2, b2 = init_params(kp, input_size, hidden_size, num_classes)

    kernel_params, nc = prepare_params(w1, b1, w2, b2)
    out = dnn_forward(x, *kernel_params, num_classes=nc)
    out = jax.block_until_ready(out)
    assert out.shape == (batch, num_classes)

    # Check against a bf16-consistent plain-JAX reference (same rounding path).
    xb = x.astype(jnp.bfloat16)
    w1b = w1.astype(jnp.bfloat16)
    w2b = w2.astype(jnp.bfloat16)
    h_ref = jnp.maximum(
        jnp.dot(xb, w1b, preferred_element_type=jnp.float32) + b1, 0.0)
    ref_bf16 = jnp.dot(h_ref.astype(jnp.bfloat16), w2b,
                       preferred_element_type=jnp.float32) + b2
    assert jnp.allclose(out, ref_bf16, atol=1e-4, rtol=1e-4)

    # Loose check against the full-f32 reference (bf16 matmul-input rounding).
    ref_f32 = jnp.maximum(x @ w1 + b1, 0.0) @ w2 + b2
    assert jnp.allclose(out, ref_f32, atol=5e-2, rtol=5e-2)

    print("KERNEL_OK")
</pallas_src>

<mosaic_0001>
module attributes {stable_mosaic.version = 11 : i64} {
  func.func @dnn_kernel(%arg0: i32, %arg1: memref<16x32xbf16, #tpu.memory_space<vmem>>, %arg2: memref<32x128xbf16, #tpu.memory_space<vmem>>, %arg3: memref<1x128xf32, #tpu.memory_space<vmem>>, %arg4: memref<128x128xbf16, #tpu.memory_space<vmem>>, %arg5: memref<1x128xf32, #tpu.memory_space<vmem>>, %arg6: memref<16x128xf32, #tpu.memory_space<vmem>>) attributes {dimension_semantics = [#tpu.dimension_semantics<parallel>], iteration_bounds = array<i64: 1>, scalar_prefetch = 0 : i64, scratch_operands = 0 : i64, tpu.core_type = #tpu.core_type<tc>, window_params = [{transform_indices = @transform_0, window_bounds = array<i64: 16, 32>}, {pipeline_mode = #tpu.pipeline_mode<synchronous>, transform_indices = @transform_1, window_bounds = array<i64: 32, 128>}, {pipeline_mode = #tpu.pipeline_mode<synchronous>, transform_indices = @transform_2, window_bounds = array<i64: 1, 128>}, {pipeline_mode = #tpu.pipeline_mode<synchronous>, transform_indices = @transform_3, window_bounds = array<i64: 128, 128>}, {pipeline_mode = #tpu.pipeline_mode<synchronous>, transform_indices = @transform_4, window_bounds = array<i64: 1, 128>}, {transform_indices = @transform_5, window_bounds = array<i64: 16, 128>}]} {
    %c0 = arith.constant 0 : index
    %c0_0 = arith.constant 0 : index
    %0 = vector.load %arg1[%c0, %c0_0] : memref<16x32xbf16, #tpu.memory_space<vmem>>, vector<16x32xbf16>
    %c0_1 = arith.constant 0 : index
    %c0_2 = arith.constant 0 : index
    %1 = vector.load %arg2[%c0_1, %c0_2] : memref<32x128xbf16, #tpu.memory_space<vmem>>, vector<32x128xbf16>
    %cst = arith.constant dense<0.000000e+00> : vector<16x128xf32>
    %2 = tpu.matmul %0, %1, %cst {dimension_numbers = #tpu.dot_dimension_numbers<[1], [0], [0], [1], [0, 0, 1, 1], [], []>} : vector<16x32xbf16>, vector<32x128xbf16>, vector<16x128xf32> -> vector<16x128xf32>
    %c0_3 = arith.constant 0 : index
    %c0_4 = arith.constant 0 : index
    %3 = vector.load %arg3[%c0_3, %c0_4] : memref<1x128xf32, #tpu.memory_space<vmem>>, vector<1x128xf32>
    %4 = vector.broadcast %3 : vector<1x128xf32> to vector<16x128xf32>
    %5 = arith.addf %2, %4 : vector<16x128xf32>
    %cst_5 = arith.constant 0.000000e+00 : f32
    %6 = vector.broadcast %cst_5 : f32 to vector<16x128xf32>
    %7 = arith.maximumf %5, %6 : vector<16x128xf32>
    %8 = arith.truncf %7 : vector<16x128xf32> to vector<16x128xbf16>
    %c0_6 = arith.constant 0 : index
    %c0_7 = arith.constant 0 : index
    %9 = vector.load %arg4[%c0_6, %c0_7] : memref<128x128xbf16, #tpu.memory_space<vmem>>, vector<128x128xbf16>
    %cst_8 = arith.constant dense<0.000000e+00> : vector<16x128xf32>
    %10 = tpu.matmul %8, %9, %cst_8 {dimension_numbers = #tpu.dot_dimension_numbers<[1], [0], [0], [1], [0, 0, 1, 1], [], []>} : vector<16x128xbf16>, vector<128x128xbf16>, vector<16x128xf32> -> vector<16x128xf32>
    %c0_9 = arith.constant 0 : index
    %c0_10 = arith.constant 0 : index
    %11 = vector.load %arg5[%c0_9, %c0_10] : memref<1x128xf32, #tpu.memory_space<vmem>>, vector<1x128xf32>
    %12 = vector.broadcast %11 : vector<1x128xf32> to vector<16x128xf32>
    %13 = arith.addf %10, %12 : vector<16x128xf32>
    %c0_11 = arith.constant 0 : index
    %c0_12 = arith.constant 0 : index
    %14 = vector.load %arg6[%c0_11, %c0_12] : memref<16x128xf32, #tpu.memory_space<vmem>>, vector<16x128xf32>
    tpu.vector_store %arg6[%c0_11, %c0_12], %13 {strides = array<i32>} : memref<16x128xf32, #tpu.memory_space<vmem>>, vector<16x128xf32>,
    return
  }
  func.func @transform_0(%arg0: i32) -> (i32, i32) {
    %c0_i32 = arith.constant 0 : i32
    %c0_i32_0 = arith.constant 0 : i32
    return %arg0, %c0_i32 : i32, i32
  }
  func.func @transform_1(%arg0: i32) -> (i32, i32) {
    %c0_i32 = arith.constant 0 : i32
    %c0_i32_0 = arith.constant 0 : i32
    %c0_i32_1 = arith.constant 0 : i32
    return %c0_i32, %c0_i32_0 : i32, i32
  }
  func.func @transform_2(%arg0: i32) -> (i32, i32) {
    %c0_i32 = arith.constant 0 : i32
    %c0_i32_0 = arith.constant 0 : i32
    %c0_i32_1 = arith.constant 0 : i32
    return %c0_i32, %c0_i32_0 : i32, i32
  }
  func.func @transform_3(%arg0: i32) -> (i32, i32) {
    %c0_i32 = arith.constant 0 : i32
    %c0_i32_0 = arith.constant 0 : i32
    %c0_i32_1 = arith.constant 0 : i32
    return %c0_i32, %c0_i32_0 : i32, i32
  }
  func.func @transform_4(%arg0: i32) -> (i32, i32) {
    %c0_i32 = arith.constant 0 : i32
    %c0_i32_0 = arith.constant 0 : i32
    %c0_i32_1 = arith.constant 0 : i32
    return %c0_i32, %c0_i32_0 : i32, i32
  }
  func.func @transform_5(%arg0: i32) -> (i32, i32) {
    %c0_i32 = arith.constant 0 : i32
    %c0_i32_0 = arith.constant 0 : i32
    return %arg0, %c0_i32 : i32, i32
  }
}

</mosaic_0001>

<llo_original>
// kernel: dnn_forward.1
$region0: #{dnn_forward.1}
  #allocation0 [shape = 'u32[]', space=smem, size = 0x4, offset = 0x4, fixed_abs, tag = 'smem constant byte address 0x4 - core index']
  #allocation1 [shape = 'u32[144,128]{1,0:T(1,128)}', space=vmem, size = 0x12000, scoped, tag = 'internal scratch']
  %s0 = inlined_call_operand.vmem [shape: bf16[16,32], index: 0, kind: input, shape index: {}]
  %s1 = inlined_call_operand.vmem [shape: bf16[32,128], index: 1, kind: input, shape index: {}]
  %s2 = inlined_call_operand.vmem [shape: f32[1,128], index: 2, kind: input, shape index: {}]
  %s3 = inlined_call_operand.hbm [shape: bf16[128,128], index: 3, kind: input, shape index: {}]
  %s4 = inlined_call_operand.vmem [shape: f32[1,128], index: 4, kind: input, shape index: {}]
  %s5 = inlined_call_operand.vmem [shape: f32[16,128], index: 5, kind: output, shape index: {}]
  %s6 = sld [smem:[#allocation0]]
  $region34: #{dnn_forward.1} parent=0
    _
  %s8 = ssub.s32 1, %s6
  %s9 = scalar_select 0, %s8, %s6
  $region1: #{dnn_forward.1} parent=0
    #allocation2 [shape = 'u8[32768]{0}', space=vmem, size = 0x8000, scoped, tag = 'input window, operand 3, single buffered']
    #allocation3 [shape = 's32[1]{0}', space=sflag, size = 0x4, scoped, tag = 'scoped memory for dnn_forward.1']
    %10 = vsyncpa [#allocation3], 0
    // Predicated region
    $region2: #{dnn_forward.1} parent=1 // pred_check
      _
    $region3: #{dnn_forward.1} parent=1 // pred_check_branch
      %12 = sbr.rel (0) target = $region5
    $region4: #{dnn_forward.1} parent=1 // pred_region
      _
    $region5: #{dnn_forward.1} parent=1 // pred_fallthru
      _
    // Predicated region
    $region6: #{dnn_forward.1} parent=1 // pred_check
      _
    $region7: #{dnn_forward.1} parent=1 // pred_check_branch
      %14 = sbr.rel (0) target = $region9
    $region8: #{dnn_forward.1} parent=1 // pred_region
      _
    $region9: #{dnn_forward.1} parent=1 // pred_fallthru
      _
    // Predicated region
    $region10: #{dnn_forward.1} parent=1 // pred_check
      _
    $region11: #{dnn_forward.1} parent=1 // pred_check_branch
      %16 = sbr.rel (0) target = $region13
    $region12: #{dnn_forward.1} parent=1 // pred_region
      _
    $region13: #{dnn_forward.1} parent=1 // pred_fallthru
      _
    // Predicated region
    $region14: #{dnn_forward.1} parent=1 // pred_check
      _
    $region15: #{dnn_forward.1} parent=1 // pred_check_branch
      %18 = sbr.rel (0) target = $region17
    $region16: #{dnn_forward.1} parent=1 // pred_region
      %s20 = ssub.s32 1024, 1024
      %21 = vsyncadd [#allocation3], %s20
      %s22 = sshll.u32 [#allocation2], 4
      %s23 = int_to_ptr.vmem [resolvable:$true] %s22
      %28 = dma.hbm_to_vmem [thread:$0]  %s3, 1024, %s23, [#allocation3], 64, 64, 4
    $region17: #{dnn_forward.1} parent=1 // pred_fallthru
      _
    // Predicated region
    $region18: #{dnn_forward.1} parent=1 // pred_check
      _
    $region19: #{dnn_forward.1} parent=1 // pred_check_branch
      %30 = sbr.rel (0) target = $region21
    $region20: #{dnn_forward.1} parent=1 // pred_region
      _
    $region21: #{dnn_forward.1} parent=1 // pred_fallthru
      _
    // Predicated region
    $region22: #{dnn_forward.1} parent=1 // pred_check
      _
    $region23: #{dnn_forward.1} parent=1 // pred_check_branch
      %32 = sbr.rel (0) target = $region25
    $region24: #{dnn_forward.1} parent=1 // pred_region
      %33 = dma.done [#allocation3], 1024
    $region25: #{dnn_forward.1} parent=1 // pred_fallthru
      _
    %v35 = vld [vmem:[%s0] sm:$0xf]
    %v36 = vld [vmem:[%s0 + $0x4] sm:$0xf]
    %v37 = vld [vmem:[%s1] sm:$0xf]
    %v38 = vld [vmem:[%s1 + $0x4] sm:$0xf]
    %v39 = vld [vmem:[%s1 + $0x8] sm:$0xf]
    %v40 = vld [vmem:[%s1 + $0xc] sm:$0xf]
    %v41 = vld [vmem:[%s2] sm:$0x1]
    %v43 = vlaneseq
    %v44 = vshrl.u32 %v43, 7
    %v45 = vsub.s32 0, %v44
    %v46 = vrot.slane %v41, %v45
    %v50 = vunpack.c.l.b16 %v35
    %v51 = vunpack.c.l.b16 %v36
    %v52 = vpack.c.b16 %v51, %v50
    %v57 = vunpack.c.l.b16 %v37
    %v58 = vunpack.c.l.b16 %v38
    %v59 = vunpack.c.l.b16 %v39
    %v60 = vunpack.c.l.b16 %v40
    %v61 = vpack.c.b16 %v58, %v57
    %v62 = vpack.c.b16 %v60, %v59
    %vm65 = vcmask 261120
    %v67 = vsel %vm65, %v52, 0
    %69 = vmatprep.subr.bf16.mxu0 0
    %70 = vmatpush1.bf16.msra.mxu0 %v61
    %71 = vmatprep.subr.bf16.mxu0 0
    %72 = vmatpush1.bf16.msra.mxu0 %v62
    %73 = vmatprep.subr.bf16.mxu0 0
    %74 = vmatpush1.bf16.msra.mxu0 0
    %75 = vmatprep.subr.bf16.mxu0 0
    %76 = vmatpush1.bf16.msra.mxu0 0
    %77 = vmatprep.subr.bf16.mxu0 0
    %78 = vmatpush1.bf16.msra.mxu0 0
    %79 = vmatprep.subr.bf16.mxu0 0
    %80 = vmatpush1.bf16.msra.mxu0 0
    %81 = vmatprep.subr.bf16.mxu0 0
    %82 = vmatpush1.bf16.msra.mxu0 0
    %83 = vmatprep.subr.bf16.mxu0 0
    %84 = vmatpush1.bf16.msra.mxu0 0
    %85 = vmatprep.subr.bf16.mxu0 0
    %86 = vmatpush1.bf16.msra.mxu0 0
    %87 = vmatprep.subr.bf16.mxu0 0
    %88 = vmatpush1.bf16.msra.mxu0 0
    %89 = vmatprep.subr.bf16.mxu0 0
    %90 = vmatpush1.bf16.msra.mxu0 0
    %91 = vmatprep.subr.bf16.mxu0 0
    %92 = vmatpush1.bf16.msra.mxu0 0
    %93 = vmatprep.subr.bf16.mxu0 0
    %94 = vmatpush1.bf16.msra.mxu0 0
    %95 = vmatprep.subr.bf16.mxu0 0
    %96 = vmatpush1.bf16.msra.mxu0 0
    %97 = vmatprep.subr.bf16.mxu0 0
    %98 = vmatpush1.bf16.msra.mxu0 0
    %99 = vmatprep.subr.bf16.mxu0 0
    %100 = vmatpush1.bf16.msra.mxu0 0
    %101 = vmatprep.mubr.bf16.mxu0 0
    %102 = vmatmul.mubr.bf16.gmra.mrb[0].mxu0 %v67
    %v103 = vpop.f32.mrb[0].mxu0
    %v104 = vadd.f32 %v46, %v103
    %v105 = vpop.f32.mrb[0].mxu0
    %v106 = vpop.f32.mrb[0].mxu0
    %v107 = vadd.f32 %v46, %v106
    %v108 = vpop.f32.mrb[0].mxu0
    %109 = vdwg.mxu0
    %v110 = vmax.f32 %v104, 0.0
    %v111 = vmax.f32 %v107, 0.0
    %v112 = vpack.c.bf16 %v111, %v110
    %v113 = vld [vmem:[#allocation2] sm:$0xf]
    %v114 = vld [vmem:[#allocation2 + $0x4] sm:$0xf]
    %v115 = vld [vmem:[#allocation2 + $0x8] sm:$0xf]
    %v116 = vld [vmem:[#allocation2 + $0xc] sm:$0xf]
    %v117 = vld [vmem:[#allocation2 + $0x10] sm:$0xf]
    %v118 = vld [vmem:[#allocation2 + $0x14] sm:$0xf]
    %v119 = vld [vmem:[#allocation2 + $0x18] sm:$0xf]
    %v120 = vld [vmem:[#allocation2 + $0x1c] sm:$0xf]
    %v121 = vld [vmem:[#allocation2 + $0x20] sm:$0xf]
    %v122 = vld [vmem:[#allocation2 + $0x24] sm:$0xf]
    %v123 = vld [vmem:[#allocation2 + $0x28] sm:$0xf]
    %v124 = vld [vmem:[#allocation2 + $0x2c] sm:$0xf]
    %v125 = vld [vmem:[#allocation2 + $0x30] sm:$0xf]
    %v126 = vld [vmem:[#allocation2 + $0x34] sm:$0xf]
    %v127 = vld [vmem:[#allocation2 + $0x38] sm:$0xf]
    %v128 = vld [vmem:[#allocation2 + $0x3c] sm:$0xf]
    %v129 = vld [vmem:[%s4] sm:$0x1]
    %v131 = vlaneseq
    %v132 = vshrl.u32 %v131, 7
    %v133 = vsub.s32 0, %v132
    %v134 = vrot.slane %v129, %v133
    %v152 = vunpack.c.l.b16 %v113
    %v153 = vunpack.c.l.b16 %v114
    %v154 = vunpack.c.l.b16 %v115
    %v155 = vunpack.c.l.b16 %v116
    %v156 = vunpack.c.l.b16 %v117
    %v157 = vunpack.c.l.b16 %v118
    %v158 = vunpack.c.l.b16 %v119
    %v159 = vunpack.c.l.b16 %v120
    %v160 = vunpack.c.l.b16 %v121
    %v161 = vunpack.c.l.b16 %v122
    %v162 = vunpack.c.l.b16 %v123
    %v163 = vunpack.c.l.b16 %v124
    %v164 = vunpack.c.l.b16 %v125
    %v165 = vunpack.c.l.b16 %v126
    %v166 = vunpack.c.l.b16 %v127
    %v167 = vunpack.c.l.b16 %v128
    %v168 = vpack.c.b16 %v153, %v152
    %v169 = vpack.c.b16 %v155, %v154
    %v170 = vpack.c.b16 %v157, %v156
    %v171 = vpack.c.b16 %v159, %v158
    %v172 = vpack.c.b16 %v161, %v160
    %v173 = vpack.c.b16 %v163, %v162
    %v174 = vpack.c.b16 %v165, %v164
    %v175 = vpack.c.b16 %v167, %v166
    %184 = vmatprep.subr.bf16.mxu0 0
    %185 = vmatpush1.bf16.msra.mxu0 %v168
    %186 = vmatprep.subr.bf16.mxu0 0
    %187 = vmatpush1.bf16.msra.mxu0 %v169
    %188 = vmatprep.subr.bf16.mxu0 0
    %189 = vmatpush1.bf16.msra.mxu0 %v170
    %190 = vmatprep.subr.bf16.mxu0 0
    %191 = vmatpush1.bf16.msra.mxu0 %v171
    %192 = vmatprep.subr.bf16.mxu0 0
    %193 = vmatpush1.bf16.msra.mxu0 %v172
    %194 = vmatprep.subr.bf16.mxu0 0
    %195 = vmatpush1.bf16.msra.mxu0 %v173
    %196 = vmatprep.subr.bf16.mxu0 0
    %197 = vmatpush1.bf16.msra.mxu0 %v174
    %198 = vmatprep.subr.bf16.mxu0 0
    %199 = vmatpush1.bf16.msra.mxu0 %v175
    %200 = vmatprep.subr.bf16.mxu0 0
    %201 = vmatpush1.bf16.msra.mxu0 0
    %202 = vmatprep.subr.bf16.mxu0 0
    %203 = vmatpush1.bf16.msra.mxu0 0
    %204 = vmatprep.subr.bf16.mxu0 0
    %205 = vmatpush1.bf16.msra.mxu0 0
    %206 = vmatprep.subr.bf16.mxu0 0
    %207 = vmatpush1.bf16.msra.mxu0 0
    %208 = vmatprep.subr.bf16.mxu0 0
    %209 = vmatpush1.bf16.msra.mxu0 0
    %210 = vmatprep.subr.bf16.mxu0 0
    %211 = vmatpush1.bf16.msra.mxu0 0
    %212 = vmatprep.subr.bf16.mxu0 0
    %213 = vmatpush1.bf16.msra.mxu0 0
    %214 = vmatprep.subr.bf16.mxu0 0
    %215 = vmatpush1.bf16.msra.mxu0 0
    %216 = vmatprep.mubr.bf16.mxu0 0
    %217 = vmatmul.mubr.bf16.gmra.mrb[0].mxu0 %v112
    %v218 = vpop.f32.mrb[0].mxu0
    %v219 = vadd.f32 %v134, %v218
    %v220 = vpop.f32.mrb[0].mxu0
    %v221 = vpop.f32.mrb[0].mxu0
    %v222 = vadd.f32 %v134, %v221
    %v223 = vpop.f32.mrb[0].mxu0
    %224 = vdwg.mxu0
    %225 = vst [vmem:[%s5] sm:$0xff] %v219
    %226 = vst [vmem:[%s5 + $0x8] sm:$0xff] %v222
    // Predicated region
    $region26: #{dnn_forward.1} parent=1 // pred_check
      _
    $region27: #{dnn_forward.1} parent=1 // pred_check_branch
      %228 = sbr.rel (0) target = $region29
    $region28: #{dnn_forward.1} parent=1 // pred_region
      _
    $region29: #{dnn_forward.1} parent=1 // pred_fallthru
      _
    // Predicated region
    $region30: #{dnn_forward.1} parent=1 // pred_check
      _
    $region31: #{dnn_forward.1} parent=1 // pred_check_branch
      %230 = sbr.rel (0) target = $region33
    $region32: #{dnn_forward.1} parent=1 // pred_region
      _
    $region33: #{dnn_forward.1} parent=1 // pred_fallthru
      _
    %231 = vsyncpa [#allocation3], 1

</llo_original>
